<compile_context>
chip_gen: v7x
topology: tpu7x:2x2x1
jax: 0.10.0
libtpu: 0.0.40
codegen_flags: <defaults>
</compile_context>

<pallas_src>
import functools

import jax
import jax.numpy as jnp
from jax.experimental import pallas as pl
from jax.experimental.pallas import tpu as pltpu

_MARGIN = 10.0


def _round_up(x, m):
    return ((x + m - 1) // m) * m


# ----------------------------------------------------------------------------
# Pallas kernels
# ----------------------------------------------------------------------------
def _siamese_fused_kernel(ia_ref, ip_ref, in_ref, wf_ref, b_ref,
                          repr_ref, loss_ref, *, vocab, margin):
    """Fused siamese forward + triplet-loss epilogue.

    ia/ip/in_ref : (B, S)   int32 VMEM  anchor / positive / negative ids
    wf_ref       : (Vp, Hp) f32   VMEM  folded table (Embedding @ W / S), zero-padded
    b_ref        : (1, Hp)  f32   VMEM  bias, zero-padded to Hp lanes
    repr_ref     : (3B, Hp) f32   VMEM  lane-dense representations (valid cols = H)
    loss_ref     : (1, 1)   f32   SMEM  triplet loss scalar
    """
    VP = wf_ref.shape[0]
    B, S = ia_ref.shape

    # counts[n, v] = #{s : ids[n, s] == v}; lane-dense over Vp, int32 accumulate.
    iota_v = jax.lax.broadcasted_iota(jnp.int32, (B, VP), 1)

    def branch_counts(ids_ref):
        # Clamp like jnp.take (out-of-range ids clamp rather than vanish).
        ids = jnp.clip(ids_ref[...], 0, vocab - 1)
        c = jnp.zeros((B, VP), jnp.int32)
        for s in range(S):                       # S is small and static
            c = c + (ids[:, s:s + 1] == iota_v).astype(jnp.int32)
        return c

    counts = jnp.concatenate(
        [branch_counts(ia_ref), branch_counts(ip_ref), branch_counts(in_ref)],
        axis=0).astype(jnp.float32)              # (3B, Vp), single int->f32 convert

    # One MXU contraction (K = Vp = multiple of 128) replaces gather+mean+Linear.
    reprs = jnp.dot(counts, wf_ref[...],
                    preferred_element_type=jnp.float32) + b_ref[...]
    repr_ref[...] = reprs                        # Hp multiple of 128 -> unmasked vst

    # Triplet-loss epilogue. Padded columns are exactly zero, so distances on
    # the padded vectors equal distances on the true H-dim representations.
    # B % 8 == 0 keeps these slices on sublane boundaries (no XLU shuffles).
    a = reprs[:B]
    p = reprs[B:2 * B]
    n = reprs[2 * B:]
    d_ap = jnp.sqrt(jnp.sum((a - p) * (a - p), axis=1, keepdims=True))  # (B, 1)
    d_an = jnp.sqrt(jnp.sum((a - n) * (a - n), axis=1, keepdims=True))  # (B, 1)
    per_ex = jnp.maximum(d_ap - d_an + margin, 0.0)
    loss_ref[0, 0] = jnp.sum(per_ex) * (1.0 / B)


def _triplet_loss_kernel(a_ref, p_ref, n_ref, loss_ref, *, margin):
    """Standalone triplet loss (API parity with SiameseModel.triplet_loss)."""
    a = a_ref[...]
    p = p_ref[...]
    n = n_ref[...]
    d_ap = jnp.sqrt(jnp.sum((a - p) * (a - p), axis=1, keepdims=True))
    d_an = jnp.sqrt(jnp.sum((a - n) * (a - n), axis=1, keepdims=True))
    per_ex = jnp.maximum(d_ap - d_an + margin, 0.0)
    loss_ref[0, 0] = jnp.sum(per_ex) * (1.0 / a.shape[0])


# ----------------------------------------------------------------------------
# Wrappers
# ----------------------------------------------------------------------------
def siamese_forward_fused(i_a, i_p, i_n, wfold_pad, bias_pad, *,
                          vocab, margin=_MARGIN):
    """ids: 3x (B, S) int32 -> ((3B, Hp) f32 reprs, (1, 1) f32 loss)."""
    B, S = i_a.shape
    assert B % 8 == 0, "batch must be a multiple of 8 (vreg sublane alignment)"
    VP, HP = wfold_pad.shape
    N = 3 * B
    kernel = functools.partial(_siamese_fused_kernel, vocab=vocab, margin=margin)
    cost = pl.CostEstimate(
        flops=2 * N * VP * HP + 2 * N * S * VP + 6 * B * HP,
        transcendentals=2 * B,
        bytes_accessed=(3 * i_a.size * 4 + wfold_pad.size * 4
                        + bias_pad.size * 4 + N * HP * 4 + 4),
    )
    # Single full-block invocation: everything fits comfortably in VMEM
    # (~80 KiB total), so no grid / pipelining is needed at these sizes.
    reprs_pad, loss = pl.pallas_call(
        kernel,
        out_shape=(
            jax.ShapeDtypeStruct((N, HP), jnp.float32),
            jax.ShapeDtypeStruct((1, 1), jnp.float32),
        ),
        in_specs=[pl.BlockSpec(memory_space=pltpu.MemorySpace.VMEM)] * 5,
        out_specs=(
            pl.BlockSpec(memory_space=pltpu.MemorySpace.VMEM),
            pl.BlockSpec(memory_space=pltpu.MemorySpace.SMEM),
        ),
        cost_estimate=cost,
    )(i_a.astype(jnp.int32), i_p.astype(jnp.int32), i_n.astype(jnp.int32),
      wfold_pad, bias_pad)
    return reprs_pad, loss


def triplet_loss_pallas(vec_a, vec_p, vec_n, margin=_MARGIN):
    """Standalone loss; pads to 128 lanes so in-kernel loads are lane-dense."""
    B, H = vec_a.shape
    HP = _round_up(H, 128)
    if HP != H:
        pad = ((0, 0), (0, HP - H))              # zero pad: L2 unchanged
        vec_a = jnp.pad(vec_a, pad)
        vec_p = jnp.pad(vec_p, pad)
        vec_n = jnp.pad(vec_n, pad)
    loss = pl.pallas_call(
        functools.partial(_triplet_loss_kernel, margin=margin),
        out_shape=jax.ShapeDtypeStruct((1, 1), jnp.float32),
        in_specs=[pl.BlockSpec(memory_space=pltpu.MemorySpace.VMEM)] * 3,
        out_specs=pl.BlockSpec(memory_space=pltpu.MemorySpace.SMEM),
    )(vec_a, vec_p, vec_n)
    return loss[0, 0]


class SiameseModelPallas:
    MARGIN = _MARGIN

    def __init__(self, vocab_size, emb_dim, hidden_size, max_word_len, key):
        k_emb, k_w, k_b = jax.random.split(key, 3)
        # Deterministic synthetic core-model parameters (injected dep in PyTorch).
        self.embedding = jax.random.normal(k_emb, (vocab_size, emb_dim),
                                           dtype=jnp.float32) * 0.1
        self.w = jax.random.normal(k_w, (emb_dim, hidden_size),
                                   dtype=jnp.float32) * 0.1
        self.b = jax.random.normal(k_b, (1, hidden_size),
                                   dtype=jnp.float32) * 0.1
        self.vocab_size = vocab_size
        self.hidden_size = hidden_size
        self.max_word_len = max_word_len

        # Fold embedding @ w / S once. Pad hidden to a lane multiple (unmasked
        # stores) AND vocab to a lane multiple (lane-dense counts, K=128 MXU).
        hp = _round_up(hidden_size, 128)
        vp = _round_up(vocab_size, 128)
        wfold = (self.embedding @ self.w) * (1.0 / max_word_len)   # (V, H)
        self.wfold_pad = jnp.zeros((vp, hp), jnp.float32).at[
            :vocab_size, :hidden_size].set(wfold)
        self.bias_pad = jnp.zeros((1, hp), jnp.float32).at[
            :, :hidden_size].set(self.b)

    def forward_with_loss(self, i_a, i_p, i_n):
        """One fused pallas_call: reprs for all three branches + triplet loss."""
        B = i_a.shape[0]
        reprs_pad, loss = siamese_forward_fused(
            i_a, i_p, i_n, self.wfold_pad, self.bias_pad,
            vocab=self.vocab_size, margin=self.MARGIN)
        reprs = reprs_pad[:, :self.hidden_size]
        return reprs[:B], reprs[B:2 * B], reprs[2 * B:], loss[0, 0]

    def forward(self, i_a, i_p, i_n, *args):
        """i_a/i_p/i_n: (batch, max_word_len) int32 -> 3x (batch, hidden) f32."""
        o_a, o_p, o_n, _ = self.forward_with_loss(i_a, i_p, i_n)
        return o_a, o_p, o_n

    @staticmethod
    def my_distance(vec1, vec2):
        return jnp.sqrt(jnp.sum((vec1 - vec2) ** 2, axis=1))

    @staticmethod
    def triplet_loss(vec_a, vec_p, vec_n):
        return triplet_loss_pallas(vec_a, vec_p, vec_n,
                                   margin=SiameseModelPallas.MARGIN)

    # TODO(synk): train_batch / SGD optimizer / backward are training-time
    # machinery, not part of the forward pass; not implemented as kernels.


if __name__ == "__main__":
    BATCH = 8            # multiple of 8: vreg sublane alignment invariant
    MAX_WORD_LEN = 8
    VOCAB = 32
    EMB = 32
    HIDDEN = 32

    key = jax.random.PRNGKey(0)
    k_model, k_a, k_p, k_n = jax.random.split(key, 4)

    model = SiameseModelPallas(VOCAB, EMB, HIDDEN, MAX_WORD_LEN, k_model)

    i_a = jax.random.randint(k_a, (BATCH, MAX_WORD_LEN), 0, VOCAB, dtype=jnp.int32)
    i_p = jax.random.randint(k_p, (BATCH, MAX_WORD_LEN), 0, VOCAB, dtype=jnp.int32)
    i_n = jax.random.randint(k_n, (BATCH, MAX_WORD_LEN), 0, VOCAB, dtype=jnp.int32)

    # One dispatch for the whole forward + fused loss.
    fwd = jax.jit(model.forward_with_loss)
    o_a, o_p, o_n, fused_loss = fwd(i_a, i_p, i_n)
    # Standalone loss kernel (API parity path only; hot path uses the fused loss).
    standalone_loss = SiameseModelPallas.triplet_loss(o_a, o_p, o_n)
    jax.block_until_ready((o_a, o_p, o_n, fused_loss, standalone_loss))

    # Plain-JAX reference (unfused formulation).
    def ref_core(ids):
        emb = jnp.take(model.embedding, ids, axis=0)
        return jnp.mean(emb, axis=1) @ model.w + model.b

    ra, rp, rn = ref_core(i_a), ref_core(i_p), ref_core(i_n)
    d_ap = jnp.linalg.norm(ra - rp, axis=1)
    d_an = jnp.linalg.norm(ra - rn, axis=1)
    ref_loss = jnp.mean(jnp.maximum(d_ap - d_an + SiameseModelPallas.MARGIN, 0.0))

    assert jnp.allclose(o_a, ra, atol=1e-5), "anchor repr mismatch"
    assert jnp.allclose(o_p, rp, atol=1e-5), "positive repr mismatch"
    assert jnp.allclose(o_n, rn, atol=1e-5), "negative repr mismatch"
    assert jnp.allclose(fused_loss, ref_loss, atol=1e-4), "fused loss mismatch"
    assert jnp.allclose(standalone_loss, ref_loss, atol=1e-4), "loss kernel mismatch"

    print("KERNEL_OK")
</pallas_src>

<mosaic_0001>
module attributes {stable_mosaic.version = 11 : i64} {
  func.func @_siamese_fused_kernel(%arg0: memref<8x8xi32, #tpu.memory_space<vmem>>, %arg1: memref<8x8xi32, #tpu.memory_space<vmem>>, %arg2: memref<8x8xi32, #tpu.memory_space<vmem>>, %arg3: memref<128x128xf32, #tpu.memory_space<vmem>>, %arg4: memref<1x128xf32, #tpu.memory_space<vmem>>, %arg5: memref<24x128xf32, #tpu.memory_space<vmem>>, %arg6: memref<1x1xf32, #tpu.memory_space<smem>>) attributes {dimension_semantics = [], scalar_prefetch = 0 : i64, scratch_operands = 0 : i64, tpu.core_type = #tpu.core_type<tc>} {
    %0 = tpu.iota {dimensions = array<i32: 1>} : vector<8x128xi32>
    %c0 = arith.constant 0 : index
    %c0_0 = arith.constant 0 : index
    %1 = vector.load %arg0[%c0, %c0_0] : memref<8x8xi32, #tpu.memory_space<vmem>>, vector<8x8xi32>
    %c0_i32 = arith.constant 0 : i32
    %c31_i32 = arith.constant 31 : i32
    %2 = vector.broadcast %c0_i32 : i32 to vector<8x8xi32>
    %3 = arith.maxsi %2, %1 : vector<8x8xi32>
    %4 = vector.broadcast %c31_i32 : i32 to vector<8x8xi32>
    %5 = arith.minsi %4, %3 : vector<8x8xi32>
    %c0_i32_1 = arith.constant 0 : i32
    %6 = vector.broadcast %c0_i32_1 : i32 to vector<8x128xi32>
    %7 = vector.extract_strided_slice %5 {offsets = [0, 0], sizes = [8, 1], strides = [1, 1]} : vector<8x8xi32> to vector<8x1xi32>
    %8 = vector.broadcast %7 : vector<8x1xi32> to vector<8x128xi32>
    %9 = arith.cmpi eq, %8, %0 : vector<8x128xi32>
    %10 = arith.extui %9 : vector<8x128xi1> to vector<8x128xi32>
    %11 = arith.addi %6, %10 : vector<8x128xi32>
    %12 = vector.extract_strided_slice %5 {offsets = [0, 1], sizes = [8, 1], strides = [1, 1]} : vector<8x8xi32> to vector<8x1xi32>
    %13 = vector.broadcast %12 : vector<8x1xi32> to vector<8x128xi32>
    %14 = arith.cmpi eq, %13, %0 : vector<8x128xi32>
    %15 = arith.extui %14 : vector<8x128xi1> to vector<8x128xi32>
    %16 = arith.addi %11, %15 : vector<8x128xi32>
    %17 = vector.extract_strided_slice %5 {offsets = [0, 2], sizes = [8, 1], strides = [1, 1]} : vector<8x8xi32> to vector<8x1xi32>
    %18 = vector.broadcast %17 : vector<8x1xi32> to vector<8x128xi32>
    %19 = arith.cmpi eq, %18, %0 : vector<8x128xi32>
    %20 = arith.extui %19 : vector<8x128xi1> to vector<8x128xi32>
    %21 = arith.addi %16, %20 : vector<8x128xi32>
    %22 = vector.extract_strided_slice %5 {offsets = [0, 3], sizes = [8, 1], strides = [1, 1]} : vector<8x8xi32> to vector<8x1xi32>
    %23 = vector.broadcast %22 : vector<8x1xi32> to vector<8x128xi32>
    %24 = arith.cmpi eq, %23, %0 : vector<8x128xi32>
    %25 = arith.extui %24 : vector<8x128xi1> to vector<8x128xi32>
    %26 = arith.addi %21, %25 : vector<8x128xi32>
    %27 = vector.extract_strided_slice %5 {offsets = [0, 4], sizes = [8, 1], strides = [1, 1]} : vector<8x8xi32> to vector<8x1xi32>
    %28 = vector.broadcast %27 : vector<8x1xi32> to vector<8x128xi32>
    %29 = arith.cmpi eq, %28, %0 : vector<8x128xi32>
    %30 = arith.extui %29 : vector<8x128xi1> to vector<8x128xi32>
    %31 = arith.addi %26, %30 : vector<8x128xi32>
    %32 = vector.extract_strided_slice %5 {offsets = [0, 5], sizes = [8, 1], strides = [1, 1]} : vector<8x8xi32> to vector<8x1xi32>
    %33 = vector.broadcast %32 : vector<8x1xi32> to vector<8x128xi32>
    %34 = arith.cmpi eq, %33, %0 : vector<8x128xi32>
    %35 = arith.extui %34 : vector<8x128xi1> to vector<8x128xi32>
    %36 = arith.addi %31, %35 : vector<8x128xi32>
    %37 = vector.extract_strided_slice %5 {offsets = [0, 6], sizes = [8, 1], strides = [1, 1]} : vector<8x8xi32> to vector<8x1xi32>
    %38 = vector.broadcast %37 : vector<8x1xi32> to vector<8x128xi32>
    %39 = arith.cmpi eq, %38, %0 : vector<8x128xi32>
    %40 = arith.extui %39 : vector<8x128xi1> to vector<8x128xi32>
    %41 = arith.addi %36, %40 : vector<8x128xi32>
    %42 = vector.extract_strided_slice %5 {offsets = [0, 7], sizes = [8, 1], strides = [1, 1]} : vector<8x8xi32> to vector<8x1xi32>
    %43 = vector.broadcast %42 : vector<8x1xi32> to vector<8x128xi32>
    %44 = arith.cmpi eq, %43, %0 : vector<8x128xi32>
    %45 = arith.extui %44 : vector<8x128xi1> to vector<8x128xi32>
    %46 = arith.addi %41, %45 : vector<8x128xi32>
    %c0_2 = arith.constant 0 : index
    %c0_3 = arith.constant 0 : index
    %47 = vector.load %arg1[%c0_2, %c0_3] : memref<8x8xi32, #tpu.memory_space<vmem>>, vector<8x8xi32>
    %c0_i32_4 = arith.constant 0 : i32
    %c31_i32_5 = arith.constant 31 : i32
    %48 = vector.broadcast %c0_i32_4 : i32 to vector<8x8xi32>
    %49 = arith.maxsi %48, %47 : vector<8x8xi32>
    %50 = vector.broadcast %c31_i32_5 : i32 to vector<8x8xi32>
    %51 = arith.minsi %50, %49 : vector<8x8xi32>
    %c0_i32_6 = arith.constant 0 : i32
    %52 = vector.broadcast %c0_i32_6 : i32 to vector<8x128xi32>
    %53 = vector.extract_strided_slice %51 {offsets = [0, 0], sizes = [8, 1], strides = [1, 1]} : vector<8x8xi32> to vector<8x1xi32>
    %54 = vector.broadcast %53 : vector<8x1xi32> to vector<8x128xi32>
    %55 = arith.cmpi eq, %54, %0 : vector<8x128xi32>
    %56 = arith.extui %55 : vector<8x128xi1> to vector<8x128xi32>
    %57 = arith.addi %52, %56 : vector<8x128xi32>
    %58 = vector.extract_strided_slice %51 {offsets = [0, 1], sizes = [8, 1], strides = [1, 1]} : vector<8x8xi32> to vector<8x1xi32>
    %59 = vector.broadcast %58 : vector<8x1xi32> to vector<8x128xi32>
    %60 = arith.cmpi eq, %59, %0 : vector<8x128xi32>
    %61 = arith.extui %60 : vector<8x128xi1> to vector<8x128xi32>
    %62 = arith.addi %57, %61 : vector<8x128xi32>
    %63 = vector.extract_strided_slice %51 {offsets = [0, 2], sizes = [8, 1], strides = [1, 1]} : vector<8x8xi32> to vector<8x1xi32>
    %64 = vector.broadcast %63 : vector<8x1xi32> to vector<8x128xi32>
    %65 = arith.cmpi eq, %64, %0 : vector<8x128xi32>
    %66 = arith.extui %65 : vector<8x128xi1> to vector<8x128xi32>
    %67 = arith.addi %62, %66 : vector<8x128xi32>
    %68 = vector.extract_strided_slice %51 {offsets = [0, 3], sizes = [8, 1], strides = [1, 1]} : vector<8x8xi32> to vector<8x1xi32>
    %69 = vector.broadcast %68 : vector<8x1xi32> to vector<8x128xi32>
    %70 = arith.cmpi eq, %69, %0 : vector<8x128xi32>
    %71 = arith.extui %70 : vector<8x128xi1> to vector<8x128xi32>
    %72 = arith.addi %67, %71 : vector<8x128xi32>
    %73 = vector.extract_strided_slice %51 {offsets = [0, 4], sizes = [8, 1], strides = [1, 1]} : vector<8x8xi32> to vector<8x1xi32>
    %74 = vector.broadcast %73 : vector<8x1xi32> to vector<8x128xi32>
    %75 = arith.cmpi eq, %74, %0 : vector<8x128xi32>
    %76 = arith.extui %75 : vector<8x128xi1> to vector<8x128xi32>
    %77 = arith.addi %72, %76 : vector<8x128xi32>
    %78 = vector.extract_strided_slice %51 {offsets = [0, 5], sizes = [8, 1], strides = [1, 1]} : vector<8x8xi32> to vector<8x1xi32>
    %79 = vector.broadcast %78 : vector<8x1xi32> to vector<8x128xi32>
    %80 = arith.cmpi eq, %79, %0 : vector<8x128xi32>
    %81 = arith.extui %80 : vector<8x128xi1> to vector<8x128xi32>
    %82 = arith.addi %77, %81 : vector<8x128xi32>
    %83 = vector.extract_strided_slice %51 {offsets = [0, 6], sizes = [8, 1], strides = [1, 1]} : vector<8x8xi32> to vector<8x1xi32>
    %84 = vector.broadcast %83 : vector<8x1xi32> to vector<8x128xi32>
    %85 = arith.cmpi eq, %84, %0 : vector<8x128xi32>
    %86 = arith.extui %85 : vector<8x128xi1> to vector<8x128xi32>
    %87 = arith.addi %82, %86 : vector<8x128xi32>
    %88 = vector.extract_strided_slice %51 {offsets = [0, 7], sizes = [8, 1], strides = [1, 1]} : vector<8x8xi32> to vector<8x1xi32>
    %89 = vector.broadcast %88 : vector<8x1xi32> to vector<8x128xi32>
    %90 = arith.cmpi eq, %89, %0 : vector<8x128xi32>
    %91 = arith.extui %90 : vector<8x128xi1> to vector<8x128xi32>
    %92 = arith.addi %87, %91 : vector<8x128xi32>
    %c0_7 = arith.constant 0 : index
    %c0_8 = arith.constant 0 : index
    %93 = vector.load %arg2[%c0_7, %c0_8] : memref<8x8xi32, #tpu.memory_space<vmem>>, vector<8x8xi32>
    %c0_i32_9 = arith.constant 0 : i32
    %c31_i32_10 = arith.constant 31 : i32
    %94 = vector.broadcast %c0_i32_9 : i32 to vector<8x8xi32>
    %95 = arith.maxsi %94, %93 : vector<8x8xi32>
    %96 = vector.broadcast %c31_i32_10 : i32 to vector<8x8xi32>
    %97 = arith.minsi %96, %95 : vector<8x8xi32>
    %c0_i32_11 = arith.constant 0 : i32
    %98 = vector.broadcast %c0_i32_11 : i32 to vector<8x128xi32>
    %99 = vector.extract_strided_slice %97 {offsets = [0, 0], sizes = [8, 1], strides = [1, 1]} : vector<8x8xi32> to vector<8x1xi32>
    %100 = vector.broadcast %99 : vector<8x1xi32> to vector<8x128xi32>
    %101 = arith.cmpi eq, %100, %0 : vector<8x128xi32>
    %102 = arith.extui %101 : vector<8x128xi1> to vector<8x128xi32>
    %103 = arith.addi %98, %102 : vector<8x128xi32>
    %104 = vector.extract_strided_slice %97 {offsets = [0, 1], sizes = [8, 1], strides = [1, 1]} : vector<8x8xi32> to vector<8x1xi32>
    %105 = vector.broadcast %104 : vector<8x1xi32> to vector<8x128xi32>
    %106 = arith.cmpi eq, %105, %0 : vector<8x128xi32>
    %107 = arith.extui %106 : vector<8x128xi1> to vector<8x128xi32>
    %108 = arith.addi %103, %107 : vector<8x128xi32>
    %109 = vector.extract_strided_slice %97 {offsets = [0, 2], sizes = [8, 1], strides = [1, 1]} : vector<8x8xi32> to vector<8x1xi32>
    %110 = vector.broadcast %109 : vector<8x1xi32> to vector<8x128xi32>
    %111 = arith.cmpi eq, %110, %0 : vector<8x128xi32>
    %112 = arith.extui %111 : vector<8x128xi1> to vector<8x128xi32>
    %113 = arith.addi %108, %112 : vector<8x128xi32>
    %114 = vector.extract_strided_slice %97 {offsets = [0, 3], sizes = [8, 1], strides = [1, 1]} : vector<8x8xi32> to vector<8x1xi32>
    %115 = vector.broadcast %114 : vector<8x1xi32> to vector<8x128xi32>
    %116 = arith.cmpi eq, %115, %0 : vector<8x128xi32>
    %117 = arith.extui %116 : vector<8x128xi1> to vector<8x128xi32>
    %118 = arith.addi %113, %117 : vector<8x128xi32>
    %119 = vector.extract_strided_slice %97 {offsets = [0, 4], sizes = [8, 1], strides = [1, 1]} : vector<8x8xi32> to vector<8x1xi32>
    %120 = vector.broadcast %119 : vector<8x1xi32> to vector<8x128xi32>
    %121 = arith.cmpi eq, %120, %0 : vector<8x128xi32>
    %122 = arith.extui %121 : vector<8x128xi1> to vector<8x128xi32>
    %123 = arith.addi %118, %122 : vector<8x128xi32>
    %124 = vector.extract_strided_slice %97 {offsets = [0, 5], sizes = [8, 1], strides = [1, 1]} : vector<8x8xi32> to vector<8x1xi32>
    %125 = vector.broadcast %124 : vector<8x1xi32> to vector<8x128xi32>
    %126 = arith.cmpi eq, %125, %0 : vector<8x128xi32>
    %127 = arith.extui %126 : vector<8x128xi1> to vector<8x128xi32>
    %128 = arith.addi %123, %127 : vector<8x128xi32>
    %129 = vector.extract_strided_slice %97 {offsets = [0, 6], sizes = [8, 1], strides = [1, 1]} : vector<8x8xi32> to vector<8x1xi32>
    %130 = vector.broadcast %129 : vector<8x1xi32> to vector<8x128xi32>
    %131 = arith.cmpi eq, %130, %0 : vector<8x128xi32>
    %132 = arith.extui %131 : vector<8x128xi1> to vector<8x128xi32>
    %133 = arith.addi %128, %132 : vector<8x128xi32>
    %134 = vector.extract_strided_slice %97 {offsets = [0, 7], sizes = [8, 1], strides = [1, 1]} : vector<8x8xi32> to vector<8x1xi32>
    %135 = vector.broadcast %134 : vector<8x1xi32> to vector<8x128xi32>
    %136 = arith.cmpi eq, %135, %0 : vector<8x128xi32>
    %137 = arith.extui %136 : vector<8x128xi1> to vector<8x128xi32>
    %138 = arith.addi %133, %137 : vector<8x128xi32>
    %139 = tpu.concatenate %46, %92, %138 in 0 : vector<8x128xi32>, vector<8x128xi32>, vector<8x128xi32> -> vector<24x128xi32>
    %140 = arith.sitofp %139 : vector<24x128xi32> to vector<24x128xf32>
    %c0_12 = arith.constant 0 : index
    %c0_13 = arith.constant 0 : index
    %141 = vector.load %arg3[%c0_12, %c0_13] : memref<128x128xf32, #tpu.memory_space<vmem>>, vector<128x128xf32>
    %cst = arith.constant dense<0.000000e+00> : vector<24x128xf32>
    %142 = tpu.matmul %140, %141, %cst {dimension_numbers = #tpu.dot_dimension_numbers<[1], [0], [0], [1], [0, 0, 1, 1], [], []>} : vector<24x128xf32>, vector<128x128xf32>, vector<24x128xf32> -> vector<24x128xf32>
    %c0_14 = arith.constant 0 : index
    %c0_15 = arith.constant 0 : index
    %143 = vector.load %arg4[%c0_14, %c0_15] : memref<1x128xf32, #tpu.memory_space<vmem>>, vector<1x128xf32>
    %144 = vector.broadcast %143 : vector<1x128xf32> to vector<24x128xf32>
    %145 = arith.addf %142, %144 : vector<24x128xf32>
    %c0_16 = arith.constant 0 : index
    %c0_17 = arith.constant 0 : index
    %146 = vector.load %arg5[%c0_16, %c0_17] : memref<24x128xf32, #tpu.memory_space<vmem>>, vector<24x128xf32>
    tpu.vector_store %arg5[%c0_16, %c0_17], %145 {strides = array<i32>} : memref<24x128xf32, #tpu.memory_space<vmem>>, vector<24x128xf32>,
    %147 = vector.extract_strided_slice %145 {offsets = [0, 0], sizes = [8, 128], strides = [1, 1]} : vector<24x128xf32> to vector<8x128xf32>
    %148 = vector.extract_strided_slice %145 {offsets = [8, 0], sizes = [8, 128], strides = [1, 1]} : vector<24x128xf32> to vector<8x128xf32>
    %149 = vector.extract_strided_slice %145 {offsets = [16, 0], sizes = [8, 128], strides = [1, 1]} : vector<24x128xf32> to vector<8x128xf32>
    %150 = arith.subf %147, %148 : vector<8x128xf32>
    %151 = arith.subf %147, %148 : vector<8x128xf32>
    %152 = arith.mulf %150, %151 : vector<8x128xf32>
    %cst_18 = arith.constant dense<0.000000e+00> : vector<8xf32>
    %153 = vector.multi_reduction <add>, %152, %cst_18 [1] : vector<8x128xf32> to vector<8xf32>
    %154 = vector.shape_cast %153 : vector<8xf32> to vector<8x1xf32>
    %155 = math.sqrt %154 : vector<8x1xf32>
    %156 = arith.subf %147, %149 : vector<8x128xf32>
    %157 = arith.subf %147, %149 : vector<8x128xf32>
    %158 = arith.mulf %156, %157 : vector<8x128xf32>
    %cst_19 = arith.constant dense<0.000000e+00> : vector<8xf32>
    %159 = vector.multi_reduction <add>, %158, %cst_19 [1] : vector<8x128xf32> to vector<8xf32>
    %160 = vector.shape_cast %159 : vector<8xf32> to vector<8x1xf32>
    %161 = math.sqrt %160 : vector<8x1xf32>
    %162 = arith.subf %155, %161 : vector<8x1xf32>
    %cst_20 = arith.constant 1.000000e+01 : f32
    %163 = vector.broadcast %cst_20 : f32 to vector<8x1xf32>
    %164 = arith.addf %162, %163 : vector<8x1xf32>
    %cst_21 = arith.constant 0.000000e+00 : f32
    %165 = vector.broadcast %cst_21 : f32 to vector<8x1xf32>
    %166 = arith.maximumf %164, %165 : vector<8x1xf32>
    %167 = vector.shape_cast %166 : vector<8x1xf32> to vector<1x8x1xf32>
    %cst_22 = arith.constant dense<0.000000e+00> : vector<1xf32>
    %168 = vector.multi_reduction <add>, %167, %cst_22 [1, 2] : vector<1x8x1xf32> to vector<1xf32>
    %169 = vector.shape_cast %168 : vector<1xf32> to vector<1x1x1xf32>
    %170 = vector.extract %169[0, 0, 0] : f32 from vector<1x1x1xf32>
    %cst_23 = arith.constant 1.250000e-01 : f32
    %171 = arith.mulf %170, %cst_23 : f32
    %c0_24 = arith.constant 0 : index
    %c0_25 = arith.constant 0 : index
    %172 = memref.load %arg6[%c0_24, %c0_25] : memref<1x1xf32, #tpu.memory_space<smem>>
    memref.store %171, %arg6[%c0_24, %c0_25] : memref<1x1xf32, #tpu.memory_space<smem>>
    return
  }
}

</mosaic_0001>

<llo_original>
// kernel: forward_with_loss.1
$region0: #{forward_with_loss.1}
  #allocation0 [shape = 'u32[]', space=smem, size = 0x4, offset = 0x4, fixed_abs, tag = 'smem constant byte address 0x4 - core index']
  #allocation1 [shape = 'u32[144,128]{1,0:T(1,128)}', space=vmem, size = 0x12000, scoped, tag = 'internal scratch']
  %s0 = inlined_call_operand.hbm [shape: s32[8,8], index: 0, kind: input, shape index: {}]
  %s1 = inlined_call_operand.hbm [shape: s32[8,8], index: 1, kind: input, shape index: {}]
  %s2 = inlined_call_operand.hbm [shape: s32[8,8], index: 2, kind: input, shape index: {}]
  %s3 = inlined_call_operand.hbm [shape: f32[128,128], index: 3, kind: input, shape index: {}]
  %s4 = inlined_call_operand.vmem [shape: f32[1,128], index: 4, kind: input, shape index: {}]
  %s5 = inlined_call_operand.vmem [shape: f32[24,128], index: 5, kind: output, shape index: {0}]
  %s6 = inlined_call_operand.hbm [shape: f32[1,1], index: 6, kind: output, shape index: {1}]
  %7 = xla_tuple %s5, %s6
  %s8 = sld [smem:[#allocation0]]
  $region54: #{forward_with_loss.1} parent=0
    _
  %s10 = ssub.s32 1, %s8
  %s11 = scalar_select 0, %s10, %s8
  $region1: #{forward_with_loss.1} parent=0
    #allocation2 [shape = 'u8[4096]{0}', space=vmem, size = 0x1000, scoped, tag = 'input window, operand 0, single buffered']
    #allocation3 [shape = 's32[1]{0}', space=sflag, size = 0x4, scoped, tag = 'scoped memory for forward_with_loss.1']
    #allocation4 [shape = 's32[1]{0}', space=sflag, size = 0x4, scoped, tag = 'scoped memory for forward_with_loss.1']
    #allocation5 [shape = 'u8[4096]{0}', space=vmem, size = 0x1000, scoped, tag = 'input window, operand 1, single buffered']
    #allocation6 [shape = 's32[1]{0}', space=sflag, size = 0x4, scoped, tag = 'scoped memory for forward_with_loss.1']
    #allocation7 [shape = 'u8[4096]{0}', space=vmem, size = 0x1000, scoped, tag = 'input window, operand 2, single buffered']
    #allocation8 [shape = 'u8[65536]{0}', space=vmem, size = 0x10000, scoped, tag = 'input window, operand 3, single buffered']
    #allocation9 [shape = 's32[1]{0}', space=sflag, size = 0x4, scoped, tag = 'scoped memory for forward_with_loss.1']
    #allocation10 [shape = 'u8[512]{0}', space=smem, size = 0x200, scoped, tag = 'output window, operand 1, single buffered']
    %12 = vsyncpa [#allocation3], 0
    %13 = vsyncpa [#allocation6], 0
    %14 = vsyncpa [#allocation9], 0
    %15 = vsyncpa [#allocation4], 0
    // Predicated region
    $region2: #{forward_with_loss.1} parent=1 // pred_check
      _
    $region3: #{forward_with_loss.1} parent=1 // pred_check_branch
      %17 = sbr.rel (0) target = $region5
    $region4: #{forward_with_loss.1} parent=1 // pred_region
      %s19 = ssub.s32 128, 128
      %20 = vsyncadd [#allocation3], %s19
      %s22 = sshll.u32 [#allocation2], 4
      %s23 = int_to_ptr.vmem [resolvable:$true] %s22
      %25 = dma.hbm_to_vmem [thread:$0]  %s0, 128, %s23, [#allocation3]
    $region5: #{forward_with_loss.1} parent=1 // pred_fallthru
      _
    // Predicated region
    $region6: #{forward_with_loss.1} parent=1 // pred_check
      _
    $region7: #{forward_with_loss.1} parent=1 // pred_check_branch
      %27 = sbr.rel (0) target = $region9
    $region8: #{forward_with_loss.1} parent=1 // pred_region
      %s29 = ssub.s32 128, 128
      %30 = vsyncadd [#allocation6], %s29
      %s32 = sshll.u32 [#allocation5], 4
      %s33 = int_to_ptr.vmem [resolvable:$true] %s32
      %35 = dma.hbm_to_vmem [thread:$0]  %s1, 128, %s33, [#allocation6]
    $region9: #{forward_with_loss.1} parent=1 // pred_fallthru
      _
    // Predicated region
    $region10: #{forward_with_loss.1} parent=1 // pred_check
      _
    $region11: #{forward_with_loss.1} parent=1 // pred_check_branch
      %37 = sbr.rel (0) target = $region13
    $region12: #{forward_with_loss.1} parent=1 // pred_region
      %s39 = ssub.s32 128, 128
      %40 = vsyncadd [#allocation6], %s39
      %s42 = sshll.u32 [#allocation7], 4
      %s43 = int_to_ptr.vmem [resolvable:$true] %s42
      %45 = dma.hbm_to_vmem [thread:$0]  %s2, 128, %s43, [#allocation6]
    $region13: #{forward_with_loss.1} parent=1 // pred_fallthru
      _
    // Predicated region
    $region14: #{forward_with_loss.1} parent=1 // pred_check
      _
    $region15: #{forward_with_loss.1} parent=1 // pred_check_branch
      %47 = sbr.rel (0) target = $region17
    $region16: #{forward_with_loss.1} parent=1 // pred_region
      %s49 = ssub.s32 2048, 2048
      %50 = vsyncadd [#allocation9], %s49
      %s51 = sshll.u32 [#allocation8], 4
      %s52 = int_to_ptr.vmem [resolvable:$true] %s51
      %57 = dma.hbm_to_vmem [thread:$0]  %s3, 2048, %s52, [#allocation9], 128, 128, 8
    $region17: #{forward_with_loss.1} parent=1 // pred_fallthru
      _
    // Predicated region
    $region18: #{forward_with_loss.1} parent=1 // pred_check
      _
    $region19: #{forward_with_loss.1} parent=1 // pred_check_branch
      %59 = sbr.rel (0) target = $region21
    $region20: #{forward_with_loss.1} parent=1 // pred_region
      _
    $region21: #{forward_with_loss.1} parent=1 // pred_fallthru
      _
    // Predicated region
    $region22: #{forward_with_loss.1} parent=1 // pred_check
      _
    $region23: #{forward_with_loss.1} parent=1 // pred_check_branch
      %61 = sbr.rel (0) target = $region25
    $region24: #{forward_with_loss.1} parent=1 // pred_region
      %62 = dma.done [#allocation3], 128
    $region25: #{forward_with_loss.1} parent=1 // pred_fallthru
      _
    // Predicated region
    $region26: #{forward_with_loss.1} parent=1 // pred_check
      _
    $region27: #{forward_with_loss.1} parent=1 // pred_check_branch
      %64 = sbr.rel (0) target = $region29
    $region28: #{forward_with_loss.1} parent=1 // pred_region
      %65 = dma.done [#allocation6], 128
    $region29: #{forward_with_loss.1} parent=1 // pred_fallthru
      _
    // Predicated region
    $region30: #{forward_with_loss.1} parent=1 // pred_check
      _
    $region31: #{forward_with_loss.1} parent=1 // pred_check_branch
      %67 = sbr.rel (0) target = $region33
    $region32: #{forward_with_loss.1} parent=1 // pred_region
      %68 = dma.done [#allocation6], 128
    $region33: #{forward_with_loss.1} parent=1 // pred_fallthru
      _
    // Predicated region
    $region34: #{forward_with_loss.1} parent=1 // pred_check
      _
    $region35: #{forward_with_loss.1} parent=1 // pred_check_branch
      %70 = sbr.rel (0) target = $region37
    $region36: #{forward_with_loss.1} parent=1 // pred_region
      %71 = dma.done [#allocation9], 2048
    $region37: #{forward_with_loss.1} parent=1 // pred_fallthru
      _
    %v72 = vlaneseq
    %v73 = vand.u32 %v72, 127
    %v74 = vld [vmem:[#allocation2] sm:$0xff]
    %vm75 = vcmp.gt.s32.totalorder %v74, 0
    %v76 = vsel %vm75, %v74, 0
    %vm77 = vcmp.lt.s32.totalorder %v76, 31
    %v78 = vsel %vm77, %v76, 31
    %79 = vset.pattern.permute.xlu0 0
    %80 = vperm.xlu0 %79, %v78
    %v81 = vpop.permute.xlu0 %80
    %vm82 = vcmp.eq.s32.totalorder %v81, %v73
    %v83 = vsel %vm82, 1, 0
    %84 = vset.pattern.permute.xlu0 1
    %85 = vperm.xlu0 %84, %v78
    %v86 = vpop.permute.xlu0 %85
    %vm87 = vcmp.eq.s32.totalorder %v86, %v73
    %v88 = vsel %vm87, 1, 0
    %v89 = vadd.s32 %v83, %v88
    %90 = vset.pattern.permute.xlu0 2
    %91 = vperm.xlu0 %90, %v78
    %v92 = vpop.permute.xlu0 %91
    %vm93 = vcmp.eq.s32.totalorder %v92, %v73
    %v94 = vsel %vm93, 1, 0
    %v95 = vadd.s32 %v89, %v94
    %96 = vset.pattern.permute.xlu0 3
    %97 = vperm.xlu0 %96, %v78
    %v98 = vpop.permute.xlu0 %97
    %vm99 = vcmp.eq.s32.totalorder %v98, %v73
    %v100 = vsel %vm99, 1, 0
    %v101 = vadd.s32 %v95, %v100
    %102 = vset.pattern.permute.xlu0 4
    %103 = vperm.xlu0 %102, %v78
    %v104 = vpop.permute.xlu0 %103
    %vm105 = vcmp.eq.s32.totalorder %v104, %v73
    %v106 = vsel %vm105, 1, 0
    %v107 = vadd.s32 %v101, %v106
    %108 = vset.pattern.permute.xlu0 5
    %109 = vperm.xlu0 %108, %v78
    %v110 = vpop.permute.xlu0 %109
    %vm111 = vcmp.eq.s32.totalorder %v110, %v73
    %v112 = vsel %vm111, 1, 0
    %v113 = vadd.s32 %v107, %v112
    %114 = vset.pattern.permute.xlu0 6
    %115 = vperm.xlu0 %114, %v78
    %v116 = vpop.permute.xlu0 %115
    %vm117 = vcmp.eq.s32.totalorder %v116, %v73
    %v118 = vsel %vm117, 1, 0
    %v119 = vadd.s32 %v113, %v118
    %120 = vset.pattern.permute.xlu0 7
    %121 = vperm.xlu0 %120, %v78
    %v122 = vpop.permute.xlu0 %121
    %vm123 = vcmp.eq.s32.totalorder %v122, %v73
    %v124 = vsel %vm123, 1, 0
    %v125 = vadd.s32 %v119, %v124
    %v126 = vld [vmem:[#allocation5] sm:$0xff]
    %vm127 = vcmp.gt.s32.totalorder %v126, 0
    %v128 = vsel %vm127, %v126, 0
    %vm129 = vcmp.lt.s32.totalorder %v128, 31
    %v130 = vsel %vm129, %v128, 31
    %131 = vset.pattern.permute.xlu0 0
    %132 = vperm.xlu0 %131, %v130
    %v133 = vpop.permute.xlu0 %132
    %vm134 = vcmp.eq.s32.totalorder %v133, %v73
    %v135 = vsel %vm134, 1, 0
    %136 = vset.pattern.permute.xlu0 1
    %137 = vperm.xlu0 %136, %v130
    %v138 = vpop.permute.xlu0 %137
    %vm139 = vcmp.eq.s32.totalorder %v138, %v73
    %v140 = vsel %vm139, 1, 0
    %v141 = vadd.s32 %v135, %v140
    %142 = vset.pattern.permute.xlu0 2
    %143 = vperm.xlu0 %142, %v130
    %v144 = vpop.permute.xlu0 %143
    %vm145 = vcmp.eq.s32.totalorder %v144, %v73
    %v146 = vsel %vm145, 1, 0
    %v147 = vadd.s32 %v141, %v146
    %148 = vset.pattern.permute.xlu0 3
    %149 = vperm.xlu0 %148, %v130
    %v150 = vpop.permute.xlu0 %149
    %vm151 = vcmp.eq.s32.totalorder %v150, %v73
    %v152 = vsel %vm151, 1, 0
    %v153 = vadd.s32 %v147, %v152
    %154 = vset.pattern.permute.xlu0 4
    %155 = vperm.xlu0 %154, %v130
    %v156 = vpop.permute.xlu0 %155
    %vm157 = vcmp.eq.s32.totalorder %v156, %v73
    %v158 = vsel %vm157, 1, 0
    %v159 = vadd.s32 %v153, %v158
    %160 = vset.pattern.permute.xlu0 5
    %161 = vperm.xlu0 %160, %v130
    %v162 = vpop.permute.xlu0 %161
    %vm163 = vcmp.eq.s32.totalorder %v162, %v73
    %v164 = vsel %vm163, 1, 0
    %v165 = vadd.s32 %v159, %v164
    %166 = vset.pattern.permute.xlu0 6
    %167 = vperm.xlu0 %166, %v130
    %v168 = vpop.permute.xlu0 %167
    %vm169 = vcmp.eq.s32.totalorder %v168, %v73
    %v170 = vsel %vm169, 1, 0
    %v171 = vadd.s32 %v165, %v170
    %172 = vset.pattern.permute.xlu0 7
    %173 = vperm.xlu0 %172, %v130
    %v174 = vpop.permute.xlu0 %173
    %vm175 = vcmp.eq.s32.totalorder %v174, %v73
    %v176 = vsel %vm175, 1, 0
    %v177 = vadd.s32 %v171, %v176
    %v178 = vld [vmem:[#allocation7] sm:$0xff]
    %vm179 = vcmp.gt.s32.totalorder %v178, 0
    %v180 = vsel %vm179, %v178, 0
    %vm181 = vcmp.lt.s32.totalorder %v180, 31
    %v182 = vsel %vm181, %v180, 31
    %183 = vset.pattern.permute.xlu0 0
    %184 = vperm.xlu0 %183, %v182
    %v185 = vpop.permute.xlu0 %184
    %vm186 = vcmp.eq.s32.totalorder %v185, %v73
    %v187 = vsel %vm186, 1, 0
    %188 = vset.pattern.permute.xlu0 1
    %189 = vperm.xlu0 %188, %v182
    %v190 = vpop.permute.xlu0 %189
    %vm191 = vcmp.eq.s32.totalorder %v190, %v73
    %v192 = vsel %vm191, 1, 0
    %v193 = vadd.s32 %v187, %v192
    %194 = vset.pattern.permute.xlu0 2
    %195 = vperm.xlu0 %194, %v182
    %v196 = vpop.permute.xlu0 %195
    %vm197 = vcmp.eq.s32.totalorder %v196, %v73
    %v198 = vsel %vm197, 1, 0
    %v199 = vadd.s32 %v193, %v198
    %200 = vset.pattern.permute.xlu0 3
    %201 = vperm.xlu0 %200, %v182
    %v202 = vpop.permute.xlu0 %201
    %vm203 = vcmp.eq.s32.totalorder %v202, %v73
    %v204 = vsel %vm203, 1, 0
    %v205 = vadd.s32 %v199, %v204
    %206 = vset.pattern.permute.xlu0 4
    %207 = vperm.xlu0 %206, %v182
    %v208 = vpop.permute.xlu0 %207
    %vm209 = vcmp.eq.s32.totalorder %v208, %v73
    %v210 = vsel %vm209, 1, 0
    %v211 = vadd.s32 %v205, %v210
    %212 = vset.pattern.permute.xlu0 5
    %213 = vperm.xlu0 %212, %v182
    %v214 = vpop.permute.xlu0 %213
    %vm215 = vcmp.eq.s32.totalorder %v214, %v73
    %v216 = vsel %vm215, 1, 0
    %v217 = vadd.s32 %v211, %v216
    %218 = vset.pattern.permute.xlu0 6
    %219 = vperm.xlu0 %218, %v182
    %v220 = vpop.permute.xlu0 %219
    %vm221 = vcmp.eq.s32.totalorder %v220, %v73
    %v222 = vsel %vm221, 1, 0
    %v223 = vadd.s32 %v217, %v222
    %224 = vset.pattern.permute.xlu0 7
    %225 = vperm.xlu0 %224, %v182
    %v226 = vpop.permute.xlu0 %225
    %vm227 = vcmp.eq.s32.totalorder %v226, %v73
    %v228 = vsel %vm227, 1, 0
    %v229 = vadd.s32 %v223, %v228
    %v230 = vcvt.s32.f32 %v125
    %v231 = vcvt.s32.f32 %v177
    %v232 = vcvt.s32.f32 %v229
    %v233 = vld [vmem:[#allocation8] sm:$0xff]
    %v234 = vld [vmem:[#allocation8 + $0x8] sm:$0xff]
    %v235 = vld [vmem:[#allocation8 + $0x10] sm:$0xff]
    %v236 = vld [vmem:[#allocation8 + $0x18] sm:$0xff]
    %v237 = vld [vmem:[#allocation8 + $0x20] sm:$0xff]
    %v238 = vld [vmem:[#allocation8 + $0x28] sm:$0xff]
    %v239 = vld [vmem:[#allocation8 + $0x30] sm:$0xff]
    %v240 = vld [vmem:[#allocation8 + $0x38] sm:$0xff]
    %v241 = vld [vmem:[#allocation8 + $0x40] sm:$0xff]
    %v242 = vld [vmem:[#allocation8 + $0x48] sm:$0xff]
    %v243 = vld [vmem:[#allocation8 + $0x50] sm:$0xff]
    %v244 = vld [vmem:[#allocation8 + $0x58] sm:$0xff]
    %v245 = vld [vmem:[#allocation8 + $0x60] sm:$0xff]
    %v246 = vld [vmem:[#allocation8 + $0x68] sm:$0xff]
    %v247 = vld [vmem:[#allocation8 + $0x70] sm:$0xff]
    %v248 = vld [vmem:[#allocation8 + $0x78] sm:$0xff]
    %v249 = vld [vmem:[%s4] sm:$0x1]
    %v251 = vlaneseq
    %v252 = vshrl.u32 %v251, 7
    %v253 = vsub.s32 0, %v252
    %v254 = vrot.slane %v249, %v253
    %256 = vmatprep.subr.mxu0 0.0
    %257 = vmatpush1.msra.mxu0 %v233
    %258 = vmatprep.subr.mxu0 0.0
    %259 = vmatpush1.msra.mxu0 %v234
    %260 = vmatprep.subr.mxu0 0.0
    %261 = vmatpush1.msra.mxu0 %v235
    %262 = vmatprep.subr.mxu0 0.0
    %263 = vmatpush1.msra.mxu0 %v236
    %264 = vmatprep.subr.mxu0 0.0
    %265 = vmatpush1.msra.mxu0 %v237
    %266 = vmatprep.subr.mxu0 0.0
    %267 = vmatpush1.msra.mxu0 %v238
    %268 = vmatprep.subr.mxu0 0.0
    %269 = vmatpush1.msra.mxu0 %v239
    %270 = vmatprep.subr.mxu0 0.0
    %271 = vmatpush1.msra.mxu0 %v240
    %272 = vmatprep.subr.mxu0 0.0
    %273 = vmatpush1.msra.mxu0 %v241
    %274 = vmatprep.subr.mxu0 0.0
    %275 = vmatpush1.msra.mxu0 %v242
    %276 = vmatprep.subr.mxu0 0.0
    %277 = vmatpush1.msra.mxu0 %v243
    %278 = vmatprep.subr.mxu0 0.0
    %279 = vmatpush1.msra.mxu0 %v244
    %280 = vmatprep.subr.mxu0 0.0
    %281 = vmatpush1.msra.mxu0 %v245
    %282 = vmatprep.subr.mxu0 0.0
    %283 = vmatpush1.msra.mxu0 %v246
    %284 = vmatprep.subr.mxu0 0.0
    %285 = vmatpush1.msra.mxu0 %v247
    %286 = vmatprep.subr.mxu0 0.0
    %287 = vmatpush1.msra.mxu0 %v248
    %288 = vmatprep.subr.mxu0 0.0
    %289 = vmatpush1.msra.mxu0 0.0
    %290 = vmatprep.subr.mxu0 0.0
    %291 = vmatpush1.msra.mxu0 0.0
    %292 = vmatprep.subr.mxu0 0.0
    %293 = vmatpush1.msra.mxu0 0.0
    %294 = vmatprep.subr.mxu0 0.0
    %295 = vmatpush1.msra.mxu0 0.0
    %296 = vmatprep.subr.mxu0 0.0
    %297 = vmatpush1.msra.mxu0 0.0
    %298 = vmatprep.subr.mxu0 0.0
    %299 = vmatpush1.msra.mxu0 0.0
    %300 = vmatprep.subr.mxu0 0.0
    %301 = vmatpush1.msra.mxu0 0.0
    %302 = vmatprep.subr.mxu0 0.0
    %303 = vmatpush1.msra.mxu0 0.0
    %304 = vmatprep.subr.mxu0 0.0
    %305 = vmatpush1.msra.mxu0 0.0
    %306 = vmatprep.subr.mxu0 0.0
    %307 = vmatpush1.msra.mxu0 0.0
    %308 = vmatprep.subr.mxu0 0.0
    %309 = vmatpush1.msra.mxu0 0.0
    %310 = vmatprep.subr.mxu0 0.0
    %311 = vmatpush1.msra.mxu0 0.0
    %312 = vmatprep.subr.mxu0 0.0
    %313 = vmatpush1.msra.mxu0 0.0
    %314 = vmatprep.subr.mxu0 0.0
    %315 = vmatpush1.msra.mxu0 0.0
    %316 = vmatprep.subr.mxu0 0.0
    %317 = vmatpush1.msra.mxu0 0.0
    %318 = vmatprep.subr.mxu0 0.0
    %319 = vmatpush1.msra.mxu0 0.0
    %320 = vmatprep.mubr.f32.mxu0 0.0
    %321 = vmatmul.mubr.f32.gmra.mrb[0].mxu0 %v230
    %v322 = vpop.f32.mrb[0].mxu0
    %v323 = vadd.f32 %v254, %v322
    %v324 = vpop.f32.mrb[0].mxu0
    %325 = vmatprep.mubr.f32.mxu0 0.0
    %326 = vmatmul.mubr.f32.gmra.mrb[0].mxu0 %v231
    %v327 = vpop.f32.mrb[0].mxu0
    %v328 = vadd.f32 %v254, %v327
    %v329 = vpop.f32.mrb[0].mxu0
    %330 = vmatprep.mubr.f32.mxu0 0.0
    %331 = vmatmul.mubr.f32.gmra.mrb[0].mxu0 %v232
    %v332 = vpop.f32.mrb[0].mxu0
    %v333 = vadd.f32 %v254, %v332
    %v334 = vpop.f32.mrb[0].mxu0
    %335 = vdwg.mxu0
    %336 = vst [vmem:[%s5] sm:$0xff] %v323
    %337 = vst [vmem:[%s5 + $0x8] sm:$0xff] %v328
    %338 = vst [vmem:[%s5 + $0x10] sm:$0xff] %v333
    %v339 = vsub.f32 %v323, %v328
    %v340 = vmul.f32 %v339, %v339
    %341 = vadd.xlane.f32.xlu0 %v340
    %v342 = vpop.xlane.xlu0 %341
    %v343 = vrsqrt.pop %v342
    %v344 = vmul.f32 %v342, %v343
    %vm345 = vcmp.eq.f32.partialorder %v342, inf
    %v346 = vsel %vm345, %v342, %v344
    %vm347 = vcmp.eq.f32.partialorder %v342, 0.0
    %v348 = vand.u32 %v342, 2147483648
    %v349 = vsel %vm347, %v348, %v346
    %v350 = vsub.f32 %v323, %v333
    %v351 = vmul.f32 %v350, %v350
    %352 = vadd.xlane.f32.xlu0 %v351
    %v353 = vpop.xlane.xlu0 %352
    %v354 = vrsqrt.pop %v353
    %v355 = vmul.f32 %v353, %v354
    %vm356 = vcmp.eq.f32.partialorder %v353, inf
    %v357 = vsel %vm356, %v353, %v355
    %vm358 = vcmp.eq.f32.partialorder %v353, 0.0
    %v359 = vand.u32 %v353, 2147483648
    %v360 = vsel %vm358, %v359, %v357
    %v361 = vsub.f32 %v349, %v360
    %v362 = vadd.f32 %v361, 10.0
    %v363 = vmax.f32 %v362, 0.0
    %vm364 = vcmask 7168
    %v365 = vsel %vm364, %v363, 0.0
    %366 = vadd.xlane.f32.xlu0 %v365
    %v367 = vpop.xlane.xlu0 %366
    %v368 = vrot.slane %v367, 4
    %v369 = vadd.f32 %v367, %v368
    %v370 = vrot.slane %v369, 2
    %v371 = vadd.f32 %v369, %v370
    %v372 = vrot.slane %v371, 1
    %v373 = vadd.f32 %v371, %v372
    %s374 = vtos %v373
    %s375 = smul.f32 %s374, 0.125
    %s376 = scalar_lea.smem [#allocation10], 0
    %377 = sst [smem:[%s376]] %s375
    // Predicated region
    $region38: #{forward_with_loss.1} parent=1 // pred_check
      _
    $region39: #{forward_with_loss.1} parent=1 // pred_check_branch
      %379 = sbr.rel (0) target = $region41
    $region40: #{forward_with_loss.1} parent=1 // pred_region
      _
    $region41: #{forward_with_loss.1} parent=1 // pred_fallthru
      _
    // Predicated region
    $region42: #{forward_with_loss.1} parent=1 // pred_check
      _
    $region43: #{forward_with_loss.1} parent=1 // pred_check_branch
      %381 = sbr.rel (0) target = $region45
    $region44: #{forward_with_loss.1} parent=1 // pred_region
      %s383 = ssub.s32 16, 16
      %384 = vsyncadd [#allocation4], %s383
      %387 = dma.smem_to_hbm [#allocation10], 16, %s6, [#allocation4]
    $region45: #{forward_with_loss.1} parent=1 // pred_fallthru
      _
    // Predicated region
    $region46: #{forward_with_loss.1} parent=1 // pred_check
      _
    $region47: #{forward_with_loss.1} parent=1 // pred_check_branch
      %389 = sbr.rel (0) target = $region49
    $region48: #{forward_with_loss.1} parent=1 // pred_region
      _
    $region49: #{forward_with_loss.1} parent=1 // pred_fallthru
      _
    // Predicated region
    $region50: #{forward_with_loss.1} parent=1 // pred_check
      _
    $region51: #{forward_with_loss.1} parent=1 // pred_check_branch
      %391 = sbr.rel (0) target = $region53
    $region52: #{forward_with_loss.1} parent=1 // pred_region
      %392 = dma.done [#allocation4], 16
    $region53: #{forward_with_loss.1} parent=1 // pred_fallthru
      _
    %393 = sfence
    %394 = vsyncpa [#allocation3], 1
    %395 = vsyncpa [#allocation6], 1
    %396 = vsyncpa [#allocation9], 1
    %397 = vsyncpa [#allocation4], 1

</llo_original>
